<compile_context>
chip_gen: v7x
topology: tpu7x:2x2x1
jax: 0.10.0
libtpu: 0.0.40
codegen_flags: <defaults>
</compile_context>

<pallas_src>
import jax
import jax.numpy as jnp
from jax.experimental import pallas as pl
from jax.experimental.pallas import tpu as pltpu

_SUBLANE = 8
_MXU_N = 256          # v6e/v7x MXU output width (multiple of 128 -> v5e-safe)
_TK_MAX = 512         # K tile; v7x-friendly with double-buffering headroom
_TM_MAX = 128
_NEG_LARGE = -1e30    # padded class lanes: exp underflows to exactly 0


def _round_up(x, m):
    return -(-x // m) * m


def _k_tiling(D):
    """K tile size and padded feature dim (shared by x-pad and W-pad)."""
    tk = min(_TK_MAX, _round_up(D, 128))
    return tk, _round_up(D, tk)


def _class_pad(num_classes):
    return _round_up(max(num_classes, 1), _MXU_N)


def prepare_softmax_head_params(w, b):
    """One-time parameter prep, hoisted out of the per-call path.

    Pads W to (D_pad, c_pad) zeros and casts to bf16; builds an f32 bias row
    whose padded class lanes are -1e30 (softmax mask baked into the bias).
    """
    D, num_classes = w.shape
    _, d_pad = _k_tiling(D)
    c_pad = _class_pad(num_classes)
    w_bf = jnp.pad(w.astype(jnp.float32),
                   ((0, d_pad - D), (0, c_pad - num_classes))
                   ).astype(jnp.bfloat16)
    b_p = jnp.pad(b.reshape(1, num_classes).astype(jnp.float32),
                  ((0, 0), (0, c_pad - num_classes)),
                  constant_values=_NEG_LARGE)
    return w_bf, b_p


def _softmax_head_kernel(x_ref, w_ref, b_ref, o_ref, acc_ref):
    k = pl.program_id(1)

    @pl.when(k == 0)
    def _():
        acc_ref[...] = jnp.zeros_like(acc_ref)

    # bf16 MXU operands, f32 accumulation. x is cast in-kernel (VPU has slack
    # in this MXU/DMA-bound regime), so no bf16 copy of x ever hits HBM.
    acc_ref[...] += jnp.dot(x_ref[...].astype(jnp.bfloat16), w_ref[...],
                            preferred_element_type=jnp.float32)

    @pl.when(k == pl.num_programs(1) - 1)
    def _():
        # Bias (and its -1e30 padded-lane mask) applied exactly once, in the
        # final-K epilogue — correct under K tiling. Softmax math stays f32.
        logits = acc_ref[...] + b_ref[...]
        m = jnp.max(logits, axis=-1, keepdims=True)
        e = jnp.exp(logits - m)
        denom = jnp.sum(e, axis=-1, keepdims=True)
        # Reciprocal on the EUP slot instead of a VALU divide.
        o_ref[...] = (e * pl.reciprocal(denom, approx=True)).astype(o_ref.dtype)


def softmax_wrapper(x_nchw, w_bf, b_p, *, num_classes):
    """softmax(x.reshape(N, D) @ W + b, axis=1) -> (N, num_classes).

    `w_bf`, `b_p` must come from `prepare_softmax_head_params`.
    """
    N = x_nchw.shape[0]
    D = 1
    for d in x_nchw.shape[1:]:
        D *= d

    tk, d_pad = _k_tiling(D)
    c_pad = _class_pad(num_classes)
    assert w_bf.shape == (d_pad, c_pad) and b_p.shape == (1, c_pad)

    tm = min(_TM_MAX, _round_up(N, _SUBLANE))
    n_pad = _round_up(N, tm)

    # Only x-side prep remains in the per-call path (zero-pad rows/features;
    # zeros contribute nothing to the matmul, padded rows are sliced off).
    x2d = x_nchw.reshape(N, D).astype(jnp.float32)
    x2d = jnp.pad(x2d, ((0, n_pad - N), (0, d_pad - D)))

    grid = (n_pad // tm, d_pad // tk)   # (batch tiles, K tiles) — reduction last

    cost = pl.CostEstimate(
        flops=2 * n_pad * d_pad * c_pad + 4 * n_pad * c_pad,
        transcendentals=n_pad * c_pad + n_pad,
        bytes_accessed=(x2d.size * 4 + w_bf.size * 2 * grid[0]
                        + b_p.size * 4 + n_pad * c_pad * 4),
    )

    out = pl.pallas_call(
        _softmax_head_kernel,
        out_shape=jax.ShapeDtypeStruct((n_pad, c_pad), jnp.float32),
        grid_spec=pltpu.PrefetchScalarGridSpec(
            num_scalar_prefetch=0,
            grid=grid,
            in_specs=[
                pl.BlockSpec((tm, tk), lambda i, k: (i, k)),     # x tile (f32)
                pl.BlockSpec((tk, c_pad), lambda i, k: (k, 0)),  # W tile (bf16)
                pl.BlockSpec((1, c_pad), lambda i, k: (0, 0)),   # bias row
            ],
            out_specs=pl.BlockSpec((tm, c_pad), lambda i, k: (i, 0)),
            scratch_shapes=[pltpu.VMEM((tm, c_pad), jnp.float32)],
        ),
        compiler_params=pltpu.CompilerParams(
            dimension_semantics=("parallel", "arbitrary"),
            vmem_limit_bytes=32 * 1024 * 1024,
        ),
        cost_estimate=cost,
    )(x2d, w_bf, b_p)

    # Strip padding back to the logical (N, num_classes) result.
    return out[:N, :num_classes]


if __name__ == "__main__":
    # Small shapes consistent with the module: batch=2, channels=4, spatial=16.
    N, C, H, W = 2, 4, 16, 16
    num_classes = 8
    D = C * H * W

    key = jax.random.PRNGKey(0)
    kx, kw, kb = jax.random.split(key, 3)

    x = jax.random.normal(kx, (N, C, H, W), dtype=jnp.float32)
    # TODO(synk): the real `net` is a ShuffleNetV2 conv backbone; it is modeled
    # here as a deterministic linear classifier head on the flattened input.
    w = jax.random.normal(kw, (D, num_classes), dtype=jnp.float32) * 0.02
    b = jax.random.normal(kb, (num_classes,), dtype=jnp.float32) * 0.02

    # One-time parameter prep (hoisted out of the per-call path).
    w_bf, b_p = jax.block_until_ready(prepare_softmax_head_params(w, b))

    run = jax.jit(softmax_wrapper, static_argnames=("num_classes",))
    out = jax.block_until_ready(run(x, w_bf, b_p, num_classes=num_classes))

    # Reference with the same bf16-operand / f32-accumulate matmul semantics.
    ref_logits = jnp.dot(x.reshape(N, D).astype(jnp.bfloat16),
                         w.astype(jnp.bfloat16),
                         preferred_element_type=jnp.float32) + b
    ref = jax.nn.softmax(ref_logits, axis=1)

    assert out.shape == (N, num_classes)
    assert jnp.allclose(out, ref, atol=1e-2, rtol=1e-2)
    assert jnp.allclose(jnp.sum(out, axis=1), jnp.ones((N,)), atol=1e-2)

    print("KERNEL_OK")
</pallas_src>

<mosaic_0001>
module attributes {stable_mosaic.version = 11 : i64} {
  func.func @_softmax_head_kernel(%arg0: i32, %arg1: i32, %arg2: memref<8x512xf32, #tpu.memory_space<vmem>>, %arg3: memref<512x256xbf16, #tpu.memory_space<vmem>>, %arg4: memref<1x256xf32, #tpu.memory_space<vmem>>, %arg5: memref<8x256xf32, #tpu.memory_space<vmem>>, %arg6: memref<8x256xf32, #tpu.memory_space<vmem>>) attributes {dimension_semantics = [#tpu.dimension_semantics<parallel>, #tpu.dimension_semantics<arbitrary>], iteration_bounds = array<i64: 1, 2>, scalar_prefetch = 0 : i64, scratch_operands = 1 : i64, tpu.core_type = #tpu.core_type<tc>, window_params = [{transform_indices = @transform_0, window_bounds = array<i64: 8, 512>}, {transform_indices = @transform_1, window_bounds = array<i64: 512, 256>}, {pipeline_mode = #tpu.pipeline_mode<synchronous>, transform_indices = @transform_2, window_bounds = array<i64: 1, 256>}, {transform_indices = @transform_3, window_bounds = array<i64: 8, 256>}]} {
    %c0_i32 = arith.constant 0 : i32
    %0 = arith.cmpi eq, %arg1, %c0_i32 : i32
    %1 = arith.extui %0 : i1 to i32
    %c0_i32_0 = arith.constant 0 : i32
    %2 = arith.cmpi ne, %1, %c0_i32_0 : i32
    scf.if %2 {
      %cst_9 = arith.constant 0.000000e+00 : f32
      %13 = vector.broadcast %cst_9 : f32 to vector<8x256xf32>
      %c0_10 = arith.constant 0 : index
      %c0_11 = arith.constant 0 : index
      %14 = vector.load %arg6[%c0_10, %c0_11] : memref<8x256xf32, #tpu.memory_space<vmem>>, vector<8x256xf32>
      tpu.vector_store %arg6[%c0_10, %c0_11], %13 {strides = array<i32>} : memref<8x256xf32, #tpu.memory_space<vmem>>, vector<8x256xf32>,
    } else {
    }
    %c0 = arith.constant 0 : index
    %c0_1 = arith.constant 0 : index
    %3 = vector.load %arg6[%c0, %c0_1] : memref<8x256xf32, #tpu.memory_space<vmem>>, vector<8x256xf32>
    %c0_2 = arith.constant 0 : index
    %c0_3 = arith.constant 0 : index
    %4 = vector.load %arg2[%c0_2, %c0_3] : memref<8x512xf32, #tpu.memory_space<vmem>>, vector<8x512xf32>
    %5 = arith.truncf %4 : vector<8x512xf32> to vector<8x512xbf16>
    %c0_4 = arith.constant 0 : index
    %c0_5 = arith.constant 0 : index
    %6 = vector.load %arg3[%c0_4, %c0_5] : memref<512x256xbf16, #tpu.memory_space<vmem>>, vector<512x256xbf16>
    %cst = arith.constant dense<0.000000e+00> : vector<8x256xf32>
    %7 = tpu.matmul %5, %6, %cst {dimension_numbers = #tpu.dot_dimension_numbers<[1], [0], [0], [1], [0, 0, 1, 1], [], []>} : vector<8x512xbf16>, vector<512x256xbf16>, vector<8x256xf32> -> vector<8x256xf32>
    %8 = arith.addf %3, %7 : vector<8x256xf32>
    %c0_6 = arith.constant 0 : index
    %c0_7 = arith.constant 0 : index
    %9 = vector.load %arg6[%c0_6, %c0_7] : memref<8x256xf32, #tpu.memory_space<vmem>>, vector<8x256xf32>
    tpu.vector_store %arg6[%c0_6, %c0_7], %8 {strides = array<i32>} : memref<8x256xf32, #tpu.memory_space<vmem>>, vector<8x256xf32>,
    %c1_i32 = arith.constant 1 : i32
    %10 = arith.cmpi eq, %arg1, %c1_i32 : i32
    %11 = arith.extui %10 : i1 to i32
    %c0_i32_8 = arith.constant 0 : i32
    %12 = arith.cmpi ne, %11, %c0_i32_8 : i32
    scf.if %12 {
      %c0_9 = arith.constant 0 : index
      %c0_10 = arith.constant 0 : index
      %13 = vector.load %arg6[%c0_9, %c0_10] : memref<8x256xf32, #tpu.memory_space<vmem>>, vector<8x256xf32>
      %c0_11 = arith.constant 0 : index
      %c0_12 = arith.constant 0 : index
      %14 = vector.load %arg4[%c0_11, %c0_12] : memref<1x256xf32, #tpu.memory_space<vmem>>, vector<1x256xf32>
      %15 = vector.broadcast %14 : vector<1x256xf32> to vector<8x256xf32>
      %16 = arith.addf %13, %15 : vector<8x256xf32>
      %cst_13 = arith.constant dense<0xFF800000> : vector<8xf32>
      %17 = vector.multi_reduction <maximumf>, %16, %cst_13 [1] : vector<8x256xf32> to vector<8xf32>
      %18 = vector.shape_cast %17 : vector<8xf32> to vector<8x1xf32>
      %19 = vector.broadcast %18 : vector<8x1xf32> to vector<8x256xf32>
      %20 = arith.subf %16, %19 : vector<8x256xf32>
      %21 = math.exp %20 : vector<8x256xf32>
      %cst_14 = arith.constant dense<0.000000e+00> : vector<8xf32>
      %22 = vector.multi_reduction <add>, %21, %cst_14 [1] : vector<8x256xf32> to vector<8xf32>
      %23 = vector.shape_cast %22 : vector<8xf32> to vector<8x1xf32>
      %24 = tpu.reciprocal %23 {approx = true} : vector<8x1xf32> -> vector<8x1xf32>
      %25 = vector.broadcast %24 : vector<8x1xf32> to vector<8x256xf32>
      %26 = arith.mulf %21, %25 : vector<8x256xf32>
      %c0_15 = arith.constant 0 : index
      %c0_16 = arith.constant 0 : index
      %27 = vector.load %arg5[%c0_15, %c0_16] : memref<8x256xf32, #tpu.memory_space<vmem>>, vector<8x256xf32>
      tpu.vector_store %arg5[%c0_15, %c0_16], %26 {strides = array<i32>} : memref<8x256xf32, #tpu.memory_space<vmem>>, vector<8x256xf32>,
    } else {
    }
    return
  }
  func.func @transform_0(%arg0: i32, %arg1: i32) -> (i32, i32) {
    %c0_i32 = arith.constant 0 : i32
    return %arg0, %arg1 : i32, i32
  }
  func.func @transform_1(%arg0: i32, %arg1: i32) -> (i32, i32) {
    %c0_i32 = arith.constant 0 : i32
    %c0_i32_0 = arith.constant 0 : i32
    return %arg1, %c0_i32 : i32, i32
  }
  func.func @transform_2(%arg0: i32, %arg1: i32) -> (i32, i32) {
    %c0_i32 = arith.constant 0 : i32
    %c0_i32_0 = arith.constant 0 : i32
    %c0_i32_1 = arith.constant 0 : i32
    return %c0_i32, %c0_i32_0 : i32, i32
  }
  func.func @transform_3(%arg0: i32, %arg1: i32) -> (i32, i32) {
    %c0_i32 = arith.constant 0 : i32
    %c0_i32_0 = arith.constant 0 : i32
    return %arg0, %c0_i32 : i32, i32
  }
}

</mosaic_0001>

<llo_original>
// kernel: softmax_wrapper.1
$region0: #{softmax_wrapper.1}
  #allocation0 [shape = 'u32[]', space=smem, size = 0x4, offset = 0x4, fixed_abs, tag = 'smem constant byte address 0x4 - core index']
  #allocation1 [shape = 'u32[144,128]{1,0:T(1,128)}', space=vmem, size = 0x12000, scoped, tag = 'internal scratch']
  #allocation2 [shape = 'f32[8,256]{1,0:T(8,128)}', space=vmem, size = 0x2000, scoped, tag = 'scratch operand']
  %s0 = inlined_call_operand.vmem [shape: f32[8,1024], index: 0, kind: input, shape index: {}]
  %s1 = inlined_call_operand.hbm [shape: bf16[1024,256], index: 1, kind: input, shape index: {}]
  %s2 = inlined_call_operand.vmem [shape: f32[1,256], index: 2, kind: input, shape index: {}]
  %s3 = inlined_call_operand.vmem [shape: f32[8,256], index: 3, kind: output, shape index: {}]
  %s4 = sld [smem:[#allocation0]]
  $region57: #{softmax_wrapper.1} parent=0
    _
  %s6 = ssub.s32 1, %s4
  %s7 = scalar_select 0, %s6, %s4
  $region1: #{softmax_wrapper.1} parent=0
    #allocation3 [shape = 'u8[524288]{0}', space=vmem, size = 0x80000, scoped, tag = 'input window, operand 1']
    #allocation4 [shape = 's32[2]{0}', space=sflag, size = 0x8, scoped, tag = 'scoped memory for softmax_wrapper.1']
    %8 = vsyncpa [#allocation4], 0
    %s9 = scalar_lea.sflag [#allocation4], 1
    %10 = vsyncpa %s9, 0
    loop: start=0, step=1, limit=4
    $region2: #{softmax_wrapper.1} parent=1 // loop_pre_header
      _
    $region3: #{softmax_wrapper.1} parent=1 // loop_header
      %s12 = sphi 0, %s16
      %p13 = scmp.ge.s32.totalorder %s12, 4
      %s19 = sphi 0, %s31
      %s20 = sphi 0, %s27
      %s21 = sphi 0, %s19
      %s22 = sphi 0, %s20
      %s23 = sphi 0, %s21
      %s24 = sphi 0, %s22
      %s36 = sphi 0, %s38
      %s39 = sphi 0, %s36
      %s40 = sphi 0, %s39
      %s56 = sphi 0, %s40
      %s62 = sphi 0, %s64
      %s65 = sphi 0, %s62
      %s66 = sphi 0, %s65
      %s82 = sphi 0, %s66
      %s86 = sphi 0, %s86
      %s88 = sphi 0, %s86
      %s89 = sphi 0, %s88
      %s103 = sphi 0, %s89
      %s109 = sphi 0, %s111
      %s112 = sphi 0, %s109
      %s113 = sphi 0, %s112
      %s129 = sphi 0, %s113
    $region4: #{softmax_wrapper.1} parent=1 // loop_header_branch
      %15 = sbr.rel (%p13) target = $region8
    $region5: #{softmax_wrapper.1} parent=1 // loop_body
      %s17 = ssub.s32 %s12, 1
      %s18 = ssub.s32 %s12, 2
      %s25 = sadd.s32 1, %s20
      %p26 = scmp.ge.s32.totalorder %s25, 2
      %s27 = scalar_select %p26, 0, %s25
      %s28 = sadd.s32 1, %s19
      %s29 = scalar_select %p26, %s28, %s19
      %p30 = scmp.ge.s32.totalorder %s29, 1
      %s31 = scalar_select %p30, 0, %s29
      %s32 = ssub.s32 %s19, %s31
      %s33 = ssub.s32 %s20, %s27
      %s34 = sor.u32 %s32, %s33
      %p35 = scmp.eq.s32.totalorder %s34, 0
      %s37 = sadd.s32 %s36, 1
      %s38 = scalar_select %p35, %s36, %s37
      %p41 = pneg %p35
      %p42 = scmp.eq.s32.totalorder %s12, 1
      %p43 = por %p41, %p42
      %p44 = scmp.ne.s32.totalorder %s36, %s39
      %p45 = scmp.eq.s32.totalorder %s12, 0
      %p46 = por %p44, %p45
      %p47 = scmp.ne.s32.totalorder %s36, %s39
      %p48 = scmp.eq.s32.totalorder %s17, 1
      %p49 = por %p47, %p48
      %p50 = scmp.ne.s32.totalorder %s39, %s40
      %p51 = scmp.eq.s32.totalorder %s17, 0
      %p52 = por %p50, %p51
      %p53 = scmp.ne.s32.totalorder %s39, %s40
      %p54 = scmp.eq.s32.totalorder %s18, 1
      %p55 = por %p53, %p54
      %p57 = scmp.ne.s32.totalorder %s40, %s56
      %p58 = scmp.eq.s32.totalorder %s18, 0
      %p59 = por %p57, %p58
      %s60 = ssub.s32 %s20, %s27
      %p61 = scmp.eq.s32.totalorder %s60, 0
      %s63 = sadd.s32 %s62, 1
      %s64 = scalar_select %p61, %s62, %s63
      %p67 = pneg %p61
      %p68 = scmp.eq.s32.totalorder %s12, 1
      %p69 = por %p67, %p68
      %p70 = scmp.ne.s32.totalorder %s62, %s65
      %p71 = scmp.eq.s32.totalorder %s12, 0
      %p72 = por %p70, %p71
      %p73 = scmp.ne.s32.totalorder %s62, %s65
      %p74 = scmp.eq.s32.totalorder %s17, 1
      %p75 = por %p73, %p74
      %p76 = scmp.ne.s32.totalorder %s65, %s66
      %p77 = scmp.eq.s32.totalorder %s17, 0
      %p78 = por %p76, %p77
      %p79 = scmp.ne.s32.totalorder %s65, %s66
      %p80 = scmp.eq.s32.totalorder %s18, 1
      %p81 = por %p79, %p80
      %p83 = scmp.ne.s32.totalorder %s66, %s82
      %p84 = scmp.eq.s32.totalorder %s18, 0
      %p85 = por %p83, %p84
      %s87 = sadd.s32 %s86, 1
      %p90 = scmp.eq.s32.totalorder %s12, 1
      %p91 = scmp.ne.s32.totalorder %s86, %s88
      %p92 = scmp.eq.s32.totalorder %s12, 0
      %p93 = por %p91, %p92
      %p94 = scmp.ne.s32.totalorder %s86, %s88
      %p95 = scmp.eq.s32.totalorder %s17, 1
      %p96 = por %p94, %p95
      %p97 = scmp.ne.s32.totalorder %s88, %s89
      %p98 = scmp.eq.s32.totalorder %s17, 0
      %p99 = por %p97, %p98
      %p100 = scmp.ne.s32.totalorder %s88, %s89
      %p101 = scmp.eq.s32.totalorder %s18, 1
      %p102 = por %p100, %p101
      %p104 = scmp.ne.s32.totalorder %s89, %s103
      %p105 = scmp.eq.s32.totalorder %s18, 0
      %p106 = por %p104, %p105
      %s107 = ssub.s32 %s19, %s31
      %p108 = scmp.eq.s32.totalorder %s107, 0
      %s110 = sadd.s32 %s109, 1
      %s111 = scalar_select %p108, %s109, %s110
      %p114 = pneg %p108
      %p115 = scmp.eq.s32.totalorder %s12, 1
      %p116 = por %p114, %p115
      %p117 = scmp.ne.s32.totalorder %s109, %s112
      %p118 = scmp.eq.s32.totalorder %s12, 0
      %p119 = por %p117, %p118
      %p120 = scmp.ne.s32.totalorder %s109, %s112
      %p121 = scmp.eq.s32.totalorder %s17, 1
      %p122 = por %p120, %p121
      %p123 = scmp.ne.s32.totalorder %s112, %s113
      %p124 = scmp.eq.s32.totalorder %s17, 0
      %p125 = por %p123, %p124
      %p126 = scmp.ne.s32.totalorder %s112, %s113
      %p127 = scmp.eq.s32.totalorder %s18, 1
      %p128 = por %p126, %p127
      %p130 = scmp.ne.s32.totalorder %s113, %s129
      %p131 = scmp.eq.s32.totalorder %s18, 0
      %p132 = por %p130, %p131
      %p133 = scmp.le.s32.totalorder 1, %s12
      %p134 = scmp.lt.s32.totalorder %s12, 3
      %p135 = pnand %p133, %p134
      %p136 = pneg %p135
      // Predicated region
      $region9: #{softmax_wrapper.1} parent=5 // pred_check
        _
      $region10: #{softmax_wrapper.1} parent=5 // pred_check_branch
        %138 = sbr.rel (%p135) target = $region12
      $region11: #{softmax_wrapper.1} parent=5 // pred_region
        %s139 = ssub.s32 %s12, 1
        // Predicated region
        $region13: #{softmax_wrapper.1} parent=11 // pred_check
          %p140 = pneg %p99
        $region14: #{softmax_wrapper.1} parent=11 // pred_check_branch
          %142 = sbr.rel (%p140) target = $region16
        $region15: #{softmax_wrapper.1} parent=11 // pred_region
          _
        $region16: #{softmax_wrapper.1} parent=11 // pred_fallthru
          _
      $region12: #{softmax_wrapper.1} parent=5 // pred_fallthru
        _
      %p143 = scmp.lt.s32.totalorder %s12, 2
      // Predicated region
      $region17: #{softmax_wrapper.1} parent=5 // pred_check
        %p144 = pneg %p143
      $region18: #{softmax_wrapper.1} parent=5 // pred_check_branch
        %146 = sbr.rel (%p144) target = $region20
      $region19: #{softmax_wrapper.1} parent=5 // pred_region
        // Predicated region
        $region21: #{softmax_wrapper.1} parent=19 // pred_check
          %p147 = pneg %p46
        $region22: #{softmax_wrapper.1} parent=19 // pred_check_branch
          %149 = sbr.rel (%p147) target = $region24
        $region23: #{softmax_wrapper.1} parent=19 // pred_region
          %s150 = smul.u32 4, %s20
          %p151 = scmp.lt.s32.totalorder %s19, 0
          %s152 = scalar_select %p151, %s19, 0
          %p153 = scmp.lt.s32.totalorder %s150, 7
          %s154 = scalar_select %p153, %s150, 7
          %s155 = smul.addr %s152, 8
          %s156 = sadd.s32 %s154, %s155
          %s157 = smul.addr %s156, 8
          %s158 = scalar_lea.vmem %s0, %s157
          %s159 = smul.u32 4, %s20
        $region24: #{softmax_wrapper.1} parent=19 // pred_fallthru
          _
        // Predicated region
        $region25: #{softmax_wrapper.1} parent=19 // pred_check
          %p160 = pneg %p72
        $region26: #{softmax_wrapper.1} parent=19 // pred_check_branch
          %162 = sbr.rel (%p160) target = $region28
        $region27: #{softmax_wrapper.1} parent=19 // pred_region
          %s163 = sand.u32 %s62, 1
          %s164 = scalar_lea.sflag [#allocation4], %s163
          %s165 = sand.u32 %s62, 1
          %s166 = smul.addr %s165, 512
          %s167 = scalar_lea.vmem [#allocation3], %s166
          %s168 = smul.u32 64, %s20
          %s170 = ssub.s32 8192, 8192
          %171 = vsyncadd %s164, %s170
          %s172 = smul.addr %s168, 2
          %s173 = smul.addr %s172, 64
          %s174 = scalar_lea.hbm %s1, %s173
          %s175 = sshll.u32 %s167, 4
          %s176 = int_to_ptr.vmem [resolvable:$true] %s175
          %181 = dma.hbm_to_vmem [thread:$0]  %s174, 8192, %s176, %s164, 128, 128, 8
        $region28: #{softmax_wrapper.1} parent=19 // pred_fallthru
          _
      $region20: #{softmax_wrapper.1} parent=5 // pred_fallthru
        _
      %p182 = scmp.le.s32.totalorder 1, %s12
      %p183 = scmp.lt.s32.totalorder %s12, 3
      %p184 = pnand %p182, %p183
      %p185 = pneg %p184
      // Predicated region
      $region29: #{softmax_wrapper.1} parent=5 // pred_check
        _
      $region30: #{softmax_wrapper.1} parent=5 // pred_check_branch
        %187 = sbr.rel (%p184) target = $region32
      $region31: #{softmax_wrapper.1} parent=5 // pred_region
        %s188 = ssub.s32 %s12, 1
        %s189 = sand.u32 %s65, 1
        %s190 = scalar_lea.sflag [#allocation4], %s189
        %s191 = sand.u32 %s65, 1
        %s192 = smul.addr %s191, 512
        %s193 = scalar_lea.vmem [#allocation3], %s192
        // Predicated region
        $region33: #{softmax_wrapper.1} parent=31 // pred_check
          %p194 = pneg %p78
        $region34: #{softmax_wrapper.1} parent=31 // pred_check_branch
          %196 = sbr.rel (%p194) target = $region36
        $region35: #{softmax_wrapper.1} parent=31 // pred_region
          %197 = dma.done %s190, 8192
        $region36: #{softmax_wrapper.1} parent=31 // pred_fallthru
          _
        %s198 = smul.u32 4, %s22
        %p199 = scmp.lt.s32.totalorder %s21, 0
        %s200 = scalar_select %p199, %s21, 0
        %p201 = scmp.lt.s32.totalorder %s198, 7
        %s202 = scalar_select %p201, %s198, 7
        %s203 = smul.addr %s200, 8
        %s204 = sadd.s32 %s202, %s203
        %s205 = smul.addr %s204, 8
        %s206 = scalar_lea.vmem %s0, %s205
        %p207 = pneg %p52
        %p208 = pneg %p49
        %s209 = sand.u32 %s65, 1
        %s210 = scalar_lea.sflag [#allocation4], %s209
        %s211 = sand.u32 %s65, 1
        %s212 = smul.addr %s211, 512
        %s213 = scalar_lea.vmem [#allocation3], %s212
        %p214 = pneg %p78
        %p215 = pneg %p75
        %p216 = pneg %p99
        %p217 = pneg %p96
        %p218 = pneg %p125
        %p219 = pneg %p122
        %p220 = scmp.lt.s32.totalorder %s21, 0
        %s221 = scalar_select %p220, %s21, 0
        %s222 = smul.addr %s221, 2
        %s223 = smul.addr %s222, 8
        %s224 = scalar_lea.vmem %s3, %s223
        %s225 = smul.u32 4, %s22
        %p226 = scmp.lt.s32.totalorder %s21, 0
        %s227 = scalar_select %p226, %s21, 0
        %p228 = scmp.lt.s32.totalorder %s225, 7
        %s229 = scalar_select %p228, %s225, 7
        %s230 = smul.addr %s227, 8
        %s231 = sadd.s32 %s229, %s230
        %s232 = smul.addr %s231, 8
        %s233 = scalar_lea.vmem %s0, %s232
        %s234 = smul.u32 4, %s22
        %s235 = smul.u32 64, %s22
        %p236 = scmp.lt.s32.totalorder %s21, 0
        %s237 = scalar_select %p236, %s21, 0
        %s238 = smul.addr %s237, 2
        %s239 = smul.addr %s238, 8
        %s240 = scalar_lea.vmem %s3, %s239
        %p241 = scmp.eq.s32.totalorder %s22, 0
        // Predicated region
        $region37: #{softmax_wrapper.1} parent=31 // pred_check
          %p242 = pneg %p241
        $region38: #{softmax_wrapper.1} parent=31 // pred_check_branch
          %244 = sbr.rel (%p242) target = $region40
        $region39: #{softmax_wrapper.1} parent=31 // pred_region
          %245 = vst [vmem:[#allocation2] sm:$0xff] 0.0
          %246 = vst [vmem:[#allocation2 + $0x8] sm:$0xff] 0.0
        $region40: #{softmax_wrapper.1} parent=31 // pred_fallthru
          _
        %v247 = vld [vmem:[#allocation2] sm:$0xff]
        %v248 = vld [vmem:[#allocation2 + $0x8] sm:$0xff]
        %v249 = vld [vmem:[%s233] sm:$0xff]
        %v250 = vld [vmem:[%s233 + $0x8] sm:$0xff]
        %v251 = vld [vmem:[%s233 + $0x10] sm:$0xff]
        %v252 = vld [vmem:[%s233 + $0x18] sm:$0xff]
        %v253 = vpack.c.bf16 %v249, %v249
        %v254 = vpack.c.bf16 %v250, %v250
        %v255 = vpack.c.bf16 %v251, %v251
        %v256 = vpack.c.bf16 %v252, %v252
        %v257 = vld [vmem:[%s193] sm:$0xff]
        %v258 = vld [vmem:[%s193 + $0x8] sm:$0xff]
        %v259 = vld [vmem:[%s193 + $0x10] sm:$0xff]
        %v260 = vld [vmem:[%s193 + $0x18] sm:$0xff]
        %v261 = vld [vmem:[%s193 + $0x20] sm:$0xff]
        %v262 = vld [vmem:[%s193 + $0x28] sm:$0xff]
        %v263 = vld [vmem:[%s193 + $0x30] sm:$0xff]
        %v264 = vld [vmem:[%s193 + $0x38] sm:$0xff]
        %v265 = vld [vmem:[%s193 + $0x40] sm:$0xff]
        %v266 = vld [vmem:[%s193 + $0x48] sm:$0xff]
        %v267 = vld [vmem:[%s193 + $0x50] sm:$0xff]
        %v268 = vld [vmem:[%s193 + $0x58] sm:$0xff]
        %v269 = vld [vmem:[%s193 + $0x60] sm:$0xff]
        %v270 = vld [vmem:[%s193 + $0x68] sm:$0xff]
        %v271 = vld [vmem:[%s193 + $0x70] sm:$0xff]
        %v272 = vld [vmem:[%s193 + $0x78] sm:$0xff]
        %v273 = vld [vmem:[%s193 + $0x80] sm:$0xff]
        %v274 = vld [vmem:[%s193 + $0x88] sm:$0xff]
        %v275 = vld [vmem:[%s193 + $0x90] sm:$0xff]
        %v276 = vld [vmem:[%s193 + $0x98] sm:$0xff]
        %v277 = vld [vmem:[%s193 + $0xa0] sm:$0xff]
        %v278 = vld [vmem:[%s193 + $0xa8] sm:$0xff]
        %v279 = vld [vmem:[%s193 + $0xb0] sm:$0xff]
        %v280 = vld [vmem:[%s193 + $0xb8] sm:$0xff]
        %v281 = vld [vmem:[%s193 + $0xc0] sm:$0xff]
        %v282 = vld [vmem:[%s193 + $0xc8] sm:$0xff]
        %v283 = vld [vmem:[%s193 + $0xd0] sm:$0xff]
        %v284 = vld [vmem:[%s193 + $0xd8] sm:$0xff]
        %v285 = vld [vmem:[%s193 + $0xe0] sm:$0xff]
        %v286 = vld [vmem:[%s193 + $0xe8] sm:$0xff]
        %v287 = vld [vmem:[%s193 + $0xf0] sm:$0xff]
        %v288 = vld [vmem:[%s193 + $0xf8] sm:$0xff]
        %v289 = vld [vmem:[%s193 + $0x100] sm:$0xff]
        %v290 = vld [vmem:[%s193 + $0x108] sm:$0xff]
        %v291 = vld [vmem:[%s193 + $0x110] sm:$0xff]
        %v292 = vld [vmem:[%s193 + $0x118] sm:$0xff]
        %v293 = vld [vmem:[%s193 + $0x120] sm:$0xff]
        %v294 = vld [vmem:[%s193 + $0x128] sm:$0xff]
        %v295 = vld [vmem:[%s193 + $0x130] sm:$0xff]
        %v296 = vld [vmem:[%s193 + $0x138] sm:$0xff]
        %v297 = vld [vmem:[%s193 + $0x140] sm:$0xff]
        %v298 = vld [vmem:[%s193 + $0x148] sm:$0xff]
        %v299 = vld [vmem:[%s193 + $0x150] sm:$0xff]
        %v300 = vld [vmem:[%s193 + $0x158] sm:$0xff]
        %v301 = vld [vmem:[%s193 + $0x160] sm:$0xff]
        %v302 = vld [vmem:[%s193 + $0x168] sm:$0xff]
        %v303 = vld [vmem:[%s193 + $0x170] sm:$0xff]
        %v304 = vld [vmem:[%s193 + $0x178] sm:$0xff]
        %v305 = vld [vmem:[%s193 + $0x180] sm:$0xff]
        %v306 = vld [vmem:[%s193 + $0x188] sm:$0xff]
        %v307 = vld [vmem:[%s193 + $0x190] sm:$0xff]
        %v308 = vld [vmem:[%s193 + $0x198] sm:$0xff]
        %v309 = vld [vmem:[%s193 + $0x1a0] sm:$0xff]
        %v310 = vld [vmem:[%s193 + $0x1a8] sm:$0xff]
        %v311 = vld [vmem:[%s193 + $0x1b0] sm:$0xff]
        %v312 = vld [vmem:[%s193 + $0x1b8] sm:$0xff]
        %v313 = vld [vmem:[%s193 + $0x1c0] sm:$0xff]
        %v314 = vld [vmem:[%s193 + $0x1c8] sm:$0xff]
        %v315 = vld [vmem:[%s193 + $0x1d0] sm:$0xff]
        %v316 = vld [vmem:[%s193 + $0x1d8] sm:$0xff]
        %v317 = vld [vmem:[%s193 + $0x1e0] sm:$0xff]
        %v318 = vld [vmem:[%s193 + $0x1e8] sm:$0xff]
        %v319 = vld [vmem:[%s193 + $0x1f0] sm:$0xff]
        %v320 = vld [vmem:[%s193 + $0x1f8] sm:$0xff]
        %v385 = vunpack.c.l.b16 %v257
        %v386 = vunpack.c.h.b16 %v257
        %v387 = vunpack.c.l.b16 %v258
        %v388 = vunpack.c.h.b16 %v258
        %v389 = vunpack.c.l.b16 %v259
        %v390 = vunpack.c.h.b16 %v259
        %v391 = vunpack.c.l.b16 %v260
        %v392 = vunpack.c.h.b16 %v260
        %v393 = vunpack.c.l.b16 %v261
        %v394 = vunpack.c.h.b16 %v261
        %v395 = vunpack.c.l.b16 %v262
        %v396 = vunpack.c.h.b16 %v262
        %v397 = vunpack.c.l.b16 %v263
        %v398 = vunpack.c.h.b16 %v263
        %v399 = vunpack.c.l.b16 %v264
        %v400 = vunpack.c.h.b16 %v264
        %v401 = vunpack.c.l.b16 %v265
        %v402 = vunpack.c.h.b16 %v265
        %v403 = vunpack.c.l.b16 %v266
        %v404 = vunpack.c.h.b16 %v266
        %v405 = vunpack.c.l.b16 %v267
        %v406 = vunpack.c.h.b16 %v267
        %v407 = vunpack.c.l.b16 %v268
        %v408 = vunpack.c.h.b16 %v268
        %v409 = vunpack.c.l.b16 %v269
        %v410 = vunpack.c.h.b16 %v269
        %v411 = vunpack.c.l.b16 %v270
        %v412 = vunpack.c.h.b16 %v270
        %v413 = vunpack.c.l.b16 %v271
        %v414 = vunpack.c.h.b16 %v271
        %v415 = vunpack.c.l.b16 %v272
        %v416 = vunpack.c.h.b16 %v272
        %v417 = vunpack.c.l.b16 %v273
        %v418 = vunpack.c.h.b16 %v273
        %v419 = vunpack.c.l.b16 %v274
        %v420 = vunpack.c.h.b16 %v274
        %v421 = vunpack.c.l.b16 %v275
        %v422 = vunpack.c.h.b16 %v275
        %v423 = vunpack.c.l.b16 %v276
        %v424 = vunpack.c.h.b16 %v276
        %v425 = vunpack.c.l.b16 %v277
        %v426 = vunpack.c.h.b16 %v277
        %v427 = vunpack.c.l.b16 %v278
        %v428 = vunpack.c.h.b16 %v278
        %v429 = vunpack.c.l.b16 %v279
        %v430 = vunpack.c.h.b16 %v279
        %v431 = vunpack.c.l.b16 %v280
        %v432 = vunpack.c.h.b16 %v280
        %v433 = vunpack.c.l.b16 %v281
        %v434 = vunpack.c.h.b16 %v281
        %v435 = vunpack.c.l.b16 %v282
        %v436 = vunpack.c.h.b16 %v282
        %v437 = vunpack.c.l.b16 %v283
        %v438 = vunpack.c.h.b16 %v283
        %v439 = vunpack.c.l.b16 %v284
        %v440 = vunpack.c.h.b16 %v284
        %v441 = vunpack.c.l.b16 %v285
        %v442 = vunpack.c.h.b16 %v285
        %v443 = vunpack.c.l.b16 %v286
        %v444 = vunpack.c.h.b16 %v286
        %v445 = vunpack.c.l.b16 %v287
        %v446 = vunpack.c.h.b16 %v287
        %v447 = vunpack.c.l.b16 %v288
        %v448 = vunpack.c.h.b16 %v288
        %v449 = vunpack.c.l.b16 %v289
        %v450 = vunpack.c.h.b16 %v289
        %v451 = vunpack.c.l.b16 %v290
        %v452 = vunpack.c.h.b16 %v290
        %v453 = vunpack.c.l.b16 %v291
        %v454 = vunpack.c.h.b16 %v291
        %v455 = vunpack.c.l.b16 %v292
        %v456 = vunpack.c.h.b16 %v292
        %v457 = vunpack.c.l.b16 %v293
        %v458 = vunpack.c.h.b16 %v293
        %v459 = vunpack.c.l.b16 %v294
        %v460 = vunpack.c.h.b16 %v294
        %v461 = vunpack.c.l.b16 %v295
        %v462 = vunpack.c.h.b16 %v295
        %v463 = vunpack.c.l.b16 %v296
        %v464 = vunpack.c.h.b16 %v296
        %v465 = vunpack.c.l.b16 %v297
        %v466 = vunpack.c.h.b16 %v297
        %v467 = vunpack.c.l.b16 %v298
        %v468 = vunpack.c.h.b16 %v298
        %v469 = vunpack.c.l.b16 %v299
        %v470 = vunpack.c.h.b16 %v299
        %v471 = vunpack.c.l.b16 %v300
        %v472 = vunpack.c.h.b16 %v300
        %v473 = vunpack.c.l.b16 %v301
        %v474 = vunpack.c.h.b16 %v301
        %v475 = vunpack.c.l.b16 %v302
        %v476 = vunpack.c.h.b16 %v302
        %v477 = vunpack.c.l.b16 %v303
        %v478 = vunpack.c.h.b16 %v303
        %v479 = vunpack.c.l.b16 %v304
        %v480 = vunpack.c.h.b16 %v304
        %v481 = vunpack.c.l.b16 %v305
        %v482 = vunpack.c.h.b16 %v305
        %v483 = vunpack.c.l.b16 %v306
        %v484 = vunpack.c.h.b16 %v306
        %v485 = vunpack.c.l.b16 %v307
        %v486 = vunpack.c.h.b16 %v307
        %v487 = vunpack.c.l.b16 %v308
        %v488 = vunpack.c.h.b16 %v308
        %v489 = vunpack.c.l.b16 %v309
        %v490 = vunpack.c.h.b16 %v309
        %v491 = vunpack.c.l.b16 %v310
        %v492 = vunpack.c.h.b16 %v310
        %v493 = vunpack.c.l.b16 %v311
        %v494 = vunpack.c.h.b16 %v311
        %v495 = vunpack.c.l.b16 %v312
        %v496 = vunpack.c.h.b16 %v312
        %v497 = vunpack.c.l.b16 %v313
        %v498 = vunpack.c.h.b16 %v313
        %v499 = vunpack.c.l.b16 %v314
        %v500 = vunpack.c.h.b16 %v314
        %v501 = vunpack.c.l.b16 %v315
        %v502 = vunpack.c.h.b16 %v315
        %v503 = vunpack.c.l.b16 %v316
        %v504 = vunpack.c.h.b16 %v316
        %v505 = vunpack.c.l.b16 %v317
        %v506 = vunpack.c.h.b16 %v317
        %v507 = vunpack.c.l.b16 %v318
        %v508 = vunpack.c.h.b16 %v318
        %v509 = vunpack.c.l.b16 %v319
        %v510 = vunpack.c.h.b16 %v319
        %v511 = vunpack.c.l.b16 %v320
        %v512 = vunpack.c.h.b16 %v320
        %v513 = vpack.c.b16 %v387, %v385
        %v514 = vpack.c.b16 %v388, %v386
        %v515 = vpack.c.b16 %v391, %v389
        %v516 = vpack.c.b16 %v392, %v390
        %v517 = vpack.c.b16 %v395, %v393
        %v518 = vpack.c.b16 %v396, %v394
        %v519 = vpack.c.b16 %v399, %v397
        %v520 = vpack.c.b16 %v400, %v398
        %v521 = vpack.c.b16 %v403, %v401
        %v522 = vpack.c.b16 %v404, %v402
        %v523 = vpack.c.b16 %v407, %v405
        %v524 = vpack.c.b16 %v408, %v406
        %v525 = vpack.c.b16 %v411, %v409
        %v526 = vpack.c.b16 %v412, %v410
        %v527 = vpack.c.b16 %v415, %v413
        %v528 = vpack.c.b16 %v416, %v414
        %v529 = vpack.c.b16 %v419, %v417
        %v530 = vpack.c.b16 %v420, %v418
        %v531 = vpack.c.b16 %v423, %v421
        %v532 = vpack.c.b16 %v424, %v422
        %v533 = vpack.c.b16 %v427, %v425
        %v534 = vpack.c.b16 %v428, %v426
        %v535 = vpack.c.b16 %v431, %v429
        %v536 = vpack.c.b16 %v432, %v430
        %v537 = vpack.c.b16 %v435, %v433
        %v538 = vpack.c.b16 %v436, %v434
        %v539 = vpack.c.b16 %v439, %v437
        %v540 = vpack.c.b16 %v440, %v438
        %v541 = vpack.c.b16 %v443, %v441
        %v542 = vpack.c.b16 %v444, %v442
        %v543 = vpack.c.b16 %v447, %v445
        %v544 = vpack.c.b16 %v448, %v446
        %v545 = vpack.c.b16 %v451, %v449
        %v546 = vpack.c.b16 %v452, %v450
        %v547 = vpack.c.b16 %v455, %v453
        %v548 = vpack.c.b16 %v456, %v454
        %v549 = vpack.c.b16 %v459, %v457
        %v550 = vpack.c.b16 %v460, %v458
        %v551 = vpack.c.b16 %v463, %v461
        %v552 = vpack.c.b16 %v464, %v462
        %v553 = vpack.c.b16 %v467, %v465
        %v554 = vpack.c.b16 %v468, %v466
        %v555 = vpack.c.b16 %v471, %v469
        %v556 = vpack.c.b16 %v472, %v470
        %v557 = vpack.c.b16 %v475, %v473
        %v558 = vpack.c.b16 %v476, %v474
        %v559 = vpack.c.b16 %v479, %v477
        %v560 = vpack.c.b16 %v480, %v478
        %v561 = vpack.c.b16 %v483, %v481
        %v562 = vpack.c.b16 %v484, %v482
        %v563 = vpack.c.b16 %v487, %v485
        %v564 = vpack.c.b16 %v488, %v486
        %v565 = vpack.c.b16 %v491, %v489
        %v566 = vpack.c.b16 %v492, %v490
        %v567 = vpack.c.b16 %v495, %v493
        %v568 = vpack.c.b16 %v496, %v494
        %v569 = vpack.c.b16 %v499, %v497
        %v570 = vpack.c.b16 %v500, %v498
        %v571 = vpack.c.b16 %v503, %v501
        %v572 = vpack.c.b16 %v504, %v502
        %v573 = vpack.c.b16 %v507, %v505
        %v574 = vpack.c.b16 %v508, %v506
        %v575 = vpack.c.b16 %v511, %v509
        %v576 = vpack.c.b16 %v512, %v510
        %641 = vmatprep.subr.bf16.mxu0 %v514
        %642 = vmatpush1.bf16.msra.mxu0 %v513
        %643 = vmatprep.subr.bf16.mxu0 %v516
        %644 = vmatpush1.bf16.msra.mxu0 %v515
        %645 = vmatprep.subr.bf16.mxu0 %v518
        %646 = vmatpush1.bf16.msra.mxu0 %v517
        %647 = vmatprep.subr.bf16.mxu0 %v520
        %648 = vmatpush1.bf16.msra.mxu0 %v519
        %649 = vmatprep.subr.bf16.mxu0 %v522
        %650 = vmatpush1.bf16.msra.mxu0 %v521
        %651 = vmatprep.subr.bf16.mxu0 %v524
        %652 = vmatpush1.bf16.msra.mxu0 %v523
        %653 = vmatprep.subr.bf16.mxu0 %v526
        %654 = vmatpush1.bf16.msra.mxu0 %v525
        %655 = vmatprep.subr.bf16.mxu0 %v528
        %656 = vmatpush1.bf16.msra.mxu0 %v527
        %657 = vmatprep.subr.bf16.mxu0 %v530
        %658 = vmatpush1.bf16.msra.mxu0 %v529
        %659 = vmatprep.subr.bf16.mxu0 %v532
        %660 = vmatpush1.bf16.msra.mxu0 %v531
        %661 = vmatprep.subr.bf16.mxu0 %v534
        %662 = vmatpush1.bf16.msra.mxu0 %v533
        %663 = vmatprep.subr.bf16.mxu0 %v536
        %664 = vmatpush1.bf16.msra.mxu0 %v535
        %665 = vmatprep.subr.bf16.mxu0 %v538
        %666 = vmatpush1.bf16.msra.mxu0 %v537
        %667 = vmatprep.subr.bf16.mxu0 %v540
        %668 = vmatpush1.bf16.msra.mxu0 %v539
        %669 = vmatprep.subr.bf16.mxu0 %v542
        %670 = vmatpush1.bf16.msra.mxu0 %v541
        %671 = vmatprep.subr.bf16.mxu0 %v544
        %672 = vmatpush1.bf16.msra.mxu0 %v543
        %673 = vmatprep.mubr.bf16.mxu0 %v254
        %674 = vmatmul.mubr.bf16.gmra.mrb[0].mxu0 %v253
        %v675 = vpop.f32.mrb[0].mxu0
        %v676 = vadd.f32 0.0, %v675
        %v677 = vpop.f32.mrb[0].mxu0
        %v678 = vadd.f32 0.0, %v677
        %v679 = vpop.f32.mrb[0].mxu0
        %v680 = vpop.f32.mrb[0].mxu0
        %681 = vdwg.mxu0
        %682 = vmatprep.subr.bf16.mxu0 %v546
        %683 = vmatpush1.bf16.msra.mxu0 %v545
        %684 = vmatprep.subr.bf16.mxu0 %v548
        %685 = vmatpush1.bf16.msra.mxu0 %v547
        %686 = vmatprep.subr.bf16.mxu0 %v550
        %687 = vmatpush1.bf16.msra.mxu0 %v549
        %688 = vmatprep.subr.bf16.mxu0 %v552
        %689 = vmatpush1.bf16.msra.mxu0 %v551
        %690 = vmatprep.subr.bf16.mxu0 %v554
        %691 = vmatpush1.bf16.msra.mxu0 %v553
        %692 = vmatprep.subr.bf16.mxu0 %v556
        %693 = vmatpush1.bf16.msra.mxu0 %v555
        %694 = vmatprep.subr.bf16.mxu0 %v558
        %695 = vmatpush1.bf16.msra.mxu0 %v557
        %696 = vmatprep.subr.bf16.mxu0 %v560
        %697 = vmatpush1.bf16.msra.mxu0 %v559
        %698 = vmatprep.subr.bf16.mxu0 %v562
        %699 = vmatpush1.bf16.msra.mxu0 %v561
        %700 = vmatprep.subr.bf16.mxu0 %v564
        %701 = vmatpush1.bf16.msra.mxu0 %v563
        %702 = vmatprep.subr.bf16.mxu0 %v566
        %703 = vmatpush1.bf16.msra.mxu0 %v565
        %704 = vmatprep.subr.bf16.mxu0 %v568
        %705 = vmatpush1.bf16.msra.mxu0 %v567
        %706 = vmatprep.subr.bf16.mxu0 %v570
        %707 = vmatpush1.bf16.msra.mxu0 %v569
        %708 = vmatprep.subr.bf16.mxu0 %v572
        %709 = vmatpush1.bf16.msra.mxu0 %v571
        %710 = vmatprep.subr.bf16.mxu0 %v574
        %711 = vmatpush1.bf16.msra.mxu0 %v573
        %712 = vmatprep.subr.bf16.mxu0 %v576
        %713 = vmatpush1.bf16.msra.mxu0 %v575
        %714 = vmatprep.mubr.bf16.mxu0 %v256
        %715 = vmatmul.mubr.bf16.gmra.mrb[0].mxu0 %v255
        %v716 = vpop.f32.mrb[0].mxu0
        %v717 = vadd.f32 %v676, %v716
        %v718 = vpop.f32.mrb[0].mxu0
        %v719 = vadd.f32 %v678, %v718
        %v720 = vpop.f32.mrb[0].mxu0
        %v721 = vpop.f32.mrb[0].mxu0
        %722 = vdwg.mxu0
        %v723 = vadd.f32 %v247, %v717
        %v724 = vadd.f32 %v248, %v719
        %725 = vst [vmem:[#allocation2] sm:$0xff] %v723
        %726 = vst [vmem:[#allocation2 + $0x8] sm:$0xff] %v724
        %p727 = scmp.eq.s32.totalorder %s22, 1
        // Predicated region
        $region41: #{softmax_wrapper.1} parent=31 // pred_check
          %p728 = pneg %p727
        $region42: #{softmax_wrapper.1} parent=31 // pred_check_branch
          %730 = sbr.rel (%p728) target = $region44
        $region43: #{softmax_wrapper.1} parent=31 // pred_region
          %v731 = vld [vmem:[#allocation2] sm:$0xff]
          %v732 = vld [vmem:[#allocation2 + $0x8] sm:$0xff]
          %v733 = vld [vmem:[%s2] sm:$0x3]
          %v735 = vlaneseq
          %v736 = vshrl.u32 %v735, 7
          %v737 = vsub.s32 0, %v736
          %v738 = vrot.slane %v733, %v737
          %v739 = vlaneseq
          %v740 = vshrl.u32 %v739, 7
          %v741 = vsub.s32 1, %v740
          %v742 = vrot.slane %v733, %v741
          %v745 = vadd.f32 %v731, %v738
          %v746 = vadd.f32 %v732, %v742
          %v747 = vmax.f32 %v745, %v746
          %748 = vmax.xlane.f32.xlu0 %v747
          %v749 = vpop.xlane.xlu0 %748
          %v750 = vsub.f32 %v745, %v749
          %v751 = vsub.f32 %v746, %v749
          %v752 = vmul.f32 %v750, 1.442695
          %v753 = vpow.pop %v752
          %v754 = vmul.f32 %v751, 1.442695
          %v755 = vpow.pop %v754
          %v756 = vadd.f32 %v753, %v755
          %757 = vadd.xlane.f32.xlu0 %v756
          %v758 = vpop.xlane.xlu0 %757
          %v759 = vrcp.pop %v758
          %v760 = vmul.f32 %v753, %v759
          %v761 = vmul.f32 %v755, %v759
          %762 = vst [vmem:[%s240] sm:$0xff] %v760
          %763 = vst [vmem:[%s240 + $0x8] sm:$0xff] %v761
        $region44: #{softmax_wrapper.1} parent=31 // pred_fallthru
          _
        %p764 = scmp.lt.s32.totalorder %s21, 0
        %s765 = scalar_select %p764, %s21, 0
        %s766 = smul.addr %s765, 2
        %s767 = smul.addr %s766, 8
        %s768 = scalar_lea.vmem %s3, %s767
        // Predicated region
        $region45: #{softmax_wrapper.1} parent=31 // pred_check
          %p769 = pneg %p122
        $region46: #{softmax_wrapper.1} parent=31 // pred_check_branch
          %771 = sbr.rel (%p769) target = $region48
        $region47: #{softmax_wrapper.1} parent=31 // pred_region
          _
        $region48: #{softmax_wrapper.1} parent=31 // pred_fallthru
          _
        // Predicated region
        $region49: #{softmax_wrapper.1} parent=31 // pred_check
          %p772 = pneg %p122
        $region50: #{softmax_wrapper.1} parent=31 // pred_check_branch
          %774 = sbr.rel (%p772) target = $region52
        $region51: #{softmax_wrapper.1} parent=31 // pred_region
          %p775 = scmp.lt.s32.totalorder %s21, 0
          %s776 = scalar_select %p775, %s21, 0
          %s777 = smul.addr %s776, 2
          %s778 = smul.addr %s777, 8
          %s779 = scalar_lea.vmem %s3, %s778
        $region52: #{softmax_wrapper.1} parent=31 // pred_fallthru
          _
      $region32: #{softmax_wrapper.1} parent=5 // pred_fallthru
        _
      %p780 = scmp.le.s32.totalorder 2, %s12
      // Predicated region
      $region53: #{softmax_wrapper.1} parent=5 // pred_check
        %p781 = pneg %p780
      $region54: #{softmax_wrapper.1} parent=5 // pred_check_branch
        %783 = sbr.rel (%p781) target = $region56
      $region55: #{softmax_wrapper.1} parent=5 // pred_region
        %s784 = ssub.s32 %s12, 2
      $region56: #{softmax_wrapper.1} parent=5 // pred_fallthru
        _
    $region6: #{softmax_wrapper.1} parent=1 // loop_footer
      %s16 = sadd.s32 1, %s12
    $region7: #{softmax_wrapper.1} parent=1 // loop_footer_branch
      %11 = sbr.rel target = $region3
    $region8: #{softmax_wrapper.1} parent=1 // loop_exit
      _
    %785 = vsyncpa [#allocation4], 1
    %s786 = scalar_lea.sflag [#allocation4], 1
    %787 = vsyncpa %s786, 1

</llo_original>
